<compile_context>
chip_gen: v7x
topology: tpu7x:2x2x1
jax: 0.10.0
libtpu: 0.0.40
codegen_flags: <defaults>
</compile_context>

<pallas_src>
import functools

import jax
import jax.numpy as jnp
from jax.experimental import pallas as pl
from jax.experimental.pallas import tpu as pltpu


def _get_quantized_range(bitwidth):
    qmax = (1 << (bitwidth - 1)) - 1
    qmin = -(1 << (bitwidth - 1))
    return qmin, qmax


def _round_up(x, m):
    return (x + m - 1) // m * m


def _cdiv(a, b):
    return -(-a // b)


def _default_use_int8_mxu():
    # v7x's MXU has no integer path (bf16/fp8 only); everywhere else use the native
    # int8 MXU.  Overridable via the wrapper argument (AOT / multi-backend setups).
    try:
        kind = jax.devices()[0].device_kind.lower()
    except Exception:
        return True
    return "v7" not in kind


def _qconv1d_kernel(xa_ref, xb_ref, w_ref, bias_ref, scale_ref, out_ref, *,
                    num_taps, dilation, tile_l, output_zero_point, qmin, qmax,
                    use_int8_mxu):
    """One (batch, C_out-tile, L-tile) grid step.

    xa_ref:    int8  [1, C_in_p, TILE_L]   current L tile of the padded input
    xb_ref:    int8  [1, C_in_p, TILE_L]   next L tile (provides the (K-1)*dil halo)
    w_ref:     int8  [K, TILE_C, C_in_p]   weights, resident across the L loop
    bias_ref:  int32 [TILE_C, 1]
    scale_ref: f32   [TILE_C, 1]           input_scale * weight_scale / output_scale
    out_ref:   int8  [1, TILE_C, TILE_L]   output tile, already in NCL layout
    """
    full = jnp.concatenate([xa_ref[0], xb_ref[0]], axis=-1)   # (C_in_p, 2*TILE_L)
    c_in_p = full.shape[0]

    if use_int8_mxu:
        # Native int8 MXU, exact int32 accumulation (matches the int32 reference).
        acc = None
        for k in range(num_taps):
            off = k * dilation
            xk = full[:, off:off + tile_l]                    # (C_in_p, TILE_L) int8
            d = jnp.dot(w_ref[k], xk, preferred_element_type=jnp.int32)
            acc = d if acc is None else acc + d
    else:
        # v7x fallback: chunk the contraction to <=512 so every bf16 dot's f32
        # partial sum is exact, then accumulate in int32 (bit-exact requantize
        # even for large C_in * K).
        acc = jnp.zeros(out_ref.shape[1:], jnp.int32)
        for k in range(num_taps):
            off = k * dilation
            xk = full[:, off:off + tile_l]
            wk = w_ref[k]
            for c0 in range(0, c_in_p, 512):
                c1 = min(c0 + 512, c_in_p)
                part = jnp.dot(wk[:, c0:c1].astype(jnp.bfloat16),
                               xk[c0:c1, :].astype(jnp.bfloat16),
                               preferred_element_type=jnp.float32)
                acc = acc + part.astype(jnp.int32)

    y = (acc + bias_ref[...]).astype(jnp.float32)             # (TILE_C, TILE_L)
    y = y * scale_ref[...] + jnp.float32(output_zero_point)
    y = jnp.round(y)                                          # round-half-to-even (torch)
    y = jnp.clip(y, jnp.float32(qmin), jnp.float32(qmax))
    out_ref[0] = y.astype(jnp.int8)


def quantized_conv1d_pallas(x, weight, bias, feature_bitwidth, weight_bitwidth,
                            input_zero_point, output_zero_point,
                            input_scale, weight_scale, output_scale,
                            stride, padding, dilation, groups,
                            use_int8_mxu=None):
    """x: int8 [N, C_in, L]; weight: int8 [C_out, C_in, K]; bias: int32 [C_out] | None."""
    del weight_bitwidth  # 8-bit weights assumed (same as the torch module defaults).
    assert x.dtype == jnp.int8 and weight.dtype == jnp.int8
    assert len(padding) == 2
    assert groups == 1  # TODO(synk): grouped conv not implemented in this kernel.

    if isinstance(stride, (tuple, list)):
        stride = stride[0]
    if isinstance(dilation, (tuple, list)):
        dilation = dilation[0]
    assert stride >= 1 and dilation >= 1
    if use_int8_mxu is None:
        use_int8_mxu = _default_use_int8_mxu()

    N, C_in, L = x.shape
    C_out, C_in_w, K = weight.shape
    assert C_in_w == C_in

    L_pad = L + padding[0] + padding[1]
    halo = dilation * (K - 1)
    L_out1 = L_pad - halo                               # stride-1 output length
    L_out = (L_pad - halo - 1) // stride + 1            # requested output length
    assert L_out1 >= 1
    # TODO(synk): stride > 1 is handled by computing the stride-1 output and
    # subsampling; a dedicated strided kernel would avoid the ~stride x extra work.

    # ---- tiling ------------------------------------------------------------
    C_in_p = _round_up(C_in, 32)                        # int8 sublane packing
    c_full = _round_up(C_out, 32)
    TILE_C = c_full if c_full <= 512 else 256
    Cp = _round_up(C_out, TILE_C)

    TILE_L = min(512, _round_up(L_out1, 128))
    TILE_L = max(TILE_L, _round_up(max(halo, 1), 128))  # halo must fit in one tile
    n_lt = _cdiv(L_out1, TILE_L)
    # Megacore (v7x): try to expose >=2 tiles on a parallel axis.
    if N == 1 and Cp == TILE_C and n_lt == 1 and L_out1 > 128:
        TILE_L = max(_round_up(_cdiv(L_out1, 2), 128), _round_up(max(halo, 1), 128))
        n_lt = _cdiv(L_out1, TILE_L)
    Lp_out = n_lt * TILE_L
    L_in_p = (n_lt + 1) * TILE_L                        # +1 tile so the halo block exists

    # ---- operand prep (pure layout, no im2col) -----------------------------
    # Length pad = semantic zero-point pad (F.pad semantics) + alignment pad
    # (those outputs are sliced away); padded channels hit zero weights.
    x_p = jnp.pad(
        x,
        ((0, 0), (0, C_in_p - C_in), (padding[0], L_in_p - L - padding[0])),
        mode="constant", constant_values=input_zero_point)

    # weight -> [K, Cp, C_in_p]; zero-padded channels contribute nothing.
    w_arr = jnp.transpose(weight, (2, 0, 1))
    w_arr = jnp.pad(w_arr, ((0, 0), (0, Cp - C_out), (0, C_in_p - C_in)))

    if bias is None:
        bias = jnp.zeros((C_out,), dtype=jnp.int32)
    bias_col = jnp.pad(bias.astype(jnp.int32), (0, Cp - C_out)).reshape(Cp, 1)
    scale = (jnp.float32(input_scale) * weight_scale.astype(jnp.float32)
             / jnp.float32(output_scale))
    scale_col = jnp.pad(scale, (0, Cp - C_out)).reshape(Cp, 1)

    qmin, qmax = _get_quantized_range(feature_bitwidth)
    kernel = functools.partial(
        _qconv1d_kernel, num_taps=K, dilation=dilation, tile_l=TILE_L,
        output_zero_point=output_zero_point, qmin=qmin, qmax=qmax,
        use_int8_mxu=use_int8_mxu)

    # Explicit VMEM budget (double-buffered inputs/outputs + in-kernel temps).
    est_vmem = (4 * C_in_p * TILE_L           # x current + halo tiles, 2 buffers each
                + 2 * K * TILE_C * C_in_p     # weight
                + 2 * TILE_C * TILE_L         # int8 output
                + 2 * C_in_p * TILE_L         # concat temp
                + 12 * TILE_C * TILE_L        # int32 acc + f32 epilogue temps
                + 32 * Cp)                    # bias / scale
    vmem_limit = int(min(56 * 2**20, max(16 * 2**20, 2 * est_vmem)))

    grid = (N, Cp // TILE_C, n_lt)
    out_p = pl.pallas_call(
        kernel,
        out_shape=jax.ShapeDtypeStruct((N, Cp, Lp_out), jnp.int8),
        grid_spec=pltpu.PrefetchScalarGridSpec(
            num_scalar_prefetch=0,
            grid=grid,
            in_specs=[
                pl.BlockSpec((1, C_in_p, TILE_L), lambda n, j, i: (n, 0, i)),
                pl.BlockSpec((1, C_in_p, TILE_L), lambda n, j, i: (n, 0, i + 1)),
                pl.BlockSpec((K, TILE_C, C_in_p), lambda n, j, i: (0, j, 0)),
                pl.BlockSpec((TILE_C, 1), lambda n, j, i: (j, 0)),
                pl.BlockSpec((TILE_C, 1), lambda n, j, i: (j, 0)),
            ],
            out_specs=pl.BlockSpec((1, TILE_C, TILE_L), lambda n, j, i: (n, j, i)),
        ),
        compiler_params=pltpu.CompilerParams(
            dimension_semantics=("parallel", "parallel", "parallel"),
            vmem_limit_bytes=vmem_limit),
    )(x_p, x_p, w_arr, bias_col, scale_col)

    # Slice away channel / length padding; subsample if stride > 1.
    return out_p[:, :C_out, :L_out1:stride]


def _reference_jax(x, weight, bias, feature_bitwidth, input_zero_point,
                   output_zero_point, input_scale, weight_scale, output_scale,
                   stride, padding, dilation):
    """Pure-JAX int32 reference mirroring the CPU path of quantized_conv1d."""
    N, C_in, L = x.shape
    C_out, _, K = weight.shape
    x_pad = jnp.pad(x.astype(jnp.int32), ((0, 0), (0, 0), (padding[0], padding[1])),
                    constant_values=input_zero_point)
    L_pad = L + padding[0] + padding[1]
    L_out = (L_pad - dilation * (K - 1) - 1) // stride + 1
    pos = jnp.arange(L_out)[:, None] * stride + jnp.arange(K)[None, :] * dilation
    x_col = jnp.transpose(x_pad[:, :, pos], (0, 2, 1, 3)).reshape(N * L_out, C_in * K)
    w_mat = weight.astype(jnp.int32).reshape(C_out, C_in * K).T
    acc = x_col @ w_mat + bias.astype(jnp.int32)[None, :]
    scale = input_scale * weight_scale.astype(jnp.float32) / output_scale
    y = acc.astype(jnp.float32) * scale[None, :] + output_zero_point
    qmin, qmax = _get_quantized_range(feature_bitwidth)
    y = jnp.clip(jnp.round(y), qmin, qmax).astype(jnp.int8)
    return jnp.transpose(y.reshape(N, L_out, C_out), (0, 2, 1))


if __name__ == "__main__":
    key = jax.random.PRNGKey(0)

    def run_case(case_key, N, C_in, L, C_out, K, stride, padding, dilation,
                 zp_in, zp_out):
        k1, k2, k3, k4 = jax.random.split(case_key, 4)
        x = jax.random.randint(k1, (N, C_in, L), -128, 128, dtype=jnp.int32).astype(jnp.int8)
        weight = jax.random.randint(k2, (C_out, C_in, K), -128, 128,
                                    dtype=jnp.int32).astype(jnp.int8)
        bias = jax.random.randint(k3, (C_out,), -512, 512, dtype=jnp.int32)
        weight_scale = jax.random.uniform(k4, (C_out,), jnp.float32, 0.01, 0.05)
        input_scale, output_scale = 0.023, 0.041
        out = quantized_conv1d_pallas(
            x, weight, bias, 8, 8, zp_in, zp_out, input_scale, weight_scale,
            output_scale, stride, padding, dilation, 1)
        out = jax.block_until_ready(out)
        ref = _reference_jax(x, weight, bias, 8, zp_in, zp_out, input_scale,
                             weight_scale, output_scale, stride, padding, dilation)
        assert out.shape == ref.shape, (out.shape, ref.shape)
        assert out.dtype == jnp.int8
        assert bool(jnp.all(out == ref)), "mismatch vs int32 reference"
        return out

    k_a, k_b = jax.random.split(key)
    # Case 1: shapes implied by the module (batch=2, channels=4, length=16).
    o1 = run_case(k_a, N=2, C_in=4, L=16, C_out=8, K=3, stride=1,
                  padding=(1, 1), dilation=1, zp_in=3, zp_out=-5)
    assert o1.shape == (2, 8, 16)
    # Case 2: strided / dilated config (exercises the stride>1 subsample fallback).
    o2 = run_case(k_b, N=2, C_in=6, L=40, C_out=10, K=5, stride=2,
                  padding=(4, 4), dilation=2, zp_in=2, zp_out=-3)
    assert o2.shape == (2, 10, 20)
    print("KERNEL_OK")
</pallas_src>

<mosaic_0001>
module attributes {stable_mosaic.version = 11 : i64} {
  func.func @_qconv1d_kernel(%arg0: i32, %arg1: i32, %arg2: i32, %arg3: memref<1x32x128xi8, #tpu.memory_space<vmem>>, %arg4: memref<1x32x128xi8, #tpu.memory_space<vmem>>, %arg5: memref<3x32x32xi8, #tpu.memory_space<vmem>>, %arg6: memref<32x1xi32, #tpu.memory_space<vmem>>, %arg7: memref<32x1xf32, #tpu.memory_space<vmem>>, %arg8: memref<1x32x128xi8, #tpu.memory_space<vmem>>) attributes {dimension_semantics = [#tpu.dimension_semantics<parallel>, #tpu.dimension_semantics<parallel>, #tpu.dimension_semantics<parallel>], iteration_bounds = array<i64: 2, 1, 1>, scalar_prefetch = 0 : i64, scratch_operands = 0 : i64, tpu.core_type = #tpu.core_type<tc>, window_params = [{transform_indices = @transform_0, window_bounds = array<i64: 1, 32, 128>}, {transform_indices = @transform_1, window_bounds = array<i64: 1, 32, 128>}, {transform_indices = @transform_2, window_bounds = array<i64: 3, 32, 32>}, {transform_indices = @transform_3, window_bounds = array<i64: 32, 1>}, {transform_indices = @transform_4, window_bounds = array<i64: 32, 1>}, {transform_indices = @transform_5, window_bounds = array<i64: 1, 32, 128>}]} {
    %c0 = arith.constant 0 : index
    %c0_0 = arith.constant 0 : index
    %c0_1 = arith.constant 0 : index
    %0 = vector.load %arg3[%c0, %c0_0, %c0_1] : memref<1x32x128xi8, #tpu.memory_space<vmem>>, vector<1x32x128xi8>
    %1 = vector.shape_cast %0 : vector<1x32x128xi8> to vector<32x128xi8>
    %c0_2 = arith.constant 0 : index
    %c0_3 = arith.constant 0 : index
    %c0_4 = arith.constant 0 : index
    %2 = vector.load %arg4[%c0_2, %c0_3, %c0_4] : memref<1x32x128xi8, #tpu.memory_space<vmem>>, vector<1x32x128xi8>
    %3 = vector.shape_cast %2 : vector<1x32x128xi8> to vector<32x128xi8>
    %4 = tpu.concatenate %1, %3 in 1 : vector<32x128xi8>, vector<32x128xi8> -> vector<32x256xi8>
    %5 = vector.extract_strided_slice %4 {offsets = [0, 0], sizes = [32, 128], strides = [1, 1]} : vector<32x256xi8> to vector<32x128xi8>
    %c0_5 = arith.constant 0 : index
    %c0_6 = arith.constant 0 : index
    %c0_7 = arith.constant 0 : index
    %6 = vector.load %arg5[%c0_5, %c0_6, %c0_7] : memref<3x32x32xi8, #tpu.memory_space<vmem>>, vector<1x32x32xi8>
    %7 = vector.shape_cast %6 : vector<1x32x32xi8> to vector<32x32xi8>
    %cst = arith.constant dense<0> : vector<32x128xi32>
    %8 = tpu.matmul %7, %5, %cst {dimension_numbers = #tpu.dot_dimension_numbers<[1], [0], [0], [1], [0, 0, 1, 1], [], []>} : vector<32x32xi8>, vector<32x128xi8>, vector<32x128xi32> -> vector<32x128xi32>
    %9 = vector.extract_strided_slice %4 {offsets = [0, 1], sizes = [32, 128], strides = [1, 1]} : vector<32x256xi8> to vector<32x128xi8>
    %c1 = arith.constant 1 : index
    %c0_8 = arith.constant 0 : index
    %c0_9 = arith.constant 0 : index
    %10 = vector.load %arg5[%c1, %c0_8, %c0_9] : memref<3x32x32xi8, #tpu.memory_space<vmem>>, vector<1x32x32xi8>
    %11 = vector.shape_cast %10 : vector<1x32x32xi8> to vector<32x32xi8>
    %cst_10 = arith.constant dense<0> : vector<32x128xi32>
    %12 = tpu.matmul %11, %9, %cst_10 {dimension_numbers = #tpu.dot_dimension_numbers<[1], [0], [0], [1], [0, 0, 1, 1], [], []>} : vector<32x32xi8>, vector<32x128xi8>, vector<32x128xi32> -> vector<32x128xi32>
    %13 = arith.addi %8, %12 : vector<32x128xi32>
    %14 = vector.extract_strided_slice %4 {offsets = [0, 2], sizes = [32, 128], strides = [1, 1]} : vector<32x256xi8> to vector<32x128xi8>
    %c2 = arith.constant 2 : index
    %c0_11 = arith.constant 0 : index
    %c0_12 = arith.constant 0 : index
    %15 = vector.load %arg5[%c2, %c0_11, %c0_12] : memref<3x32x32xi8, #tpu.memory_space<vmem>>, vector<1x32x32xi8>
    %16 = vector.shape_cast %15 : vector<1x32x32xi8> to vector<32x32xi8>
    %cst_13 = arith.constant dense<0> : vector<32x128xi32>
    %17 = tpu.matmul %16, %14, %cst_13 {dimension_numbers = #tpu.dot_dimension_numbers<[1], [0], [0], [1], [0, 0, 1, 1], [], []>} : vector<32x32xi8>, vector<32x128xi8>, vector<32x128xi32> -> vector<32x128xi32>
    %18 = arith.addi %13, %17 : vector<32x128xi32>
    %c0_14 = arith.constant 0 : index
    %c0_15 = arith.constant 0 : index
    %19 = vector.load %arg6[%c0_14, %c0_15] : memref<32x1xi32, #tpu.memory_space<vmem>>, vector<32x1xi32>
    %20 = vector.broadcast %19 : vector<32x1xi32> to vector<32x128xi32>
    %21 = arith.addi %18, %20 : vector<32x128xi32>
    %22 = arith.sitofp %21 : vector<32x128xi32> to vector<32x128xf32>
    %c0_16 = arith.constant 0 : index
    %c0_17 = arith.constant 0 : index
    %23 = vector.load %arg7[%c0_16, %c0_17] : memref<32x1xf32, #tpu.memory_space<vmem>>, vector<32x1xf32>
    %24 = vector.broadcast %23 : vector<32x1xf32> to vector<32x128xf32>
    %25 = arith.mulf %22, %24 : vector<32x128xf32>
    %cst_18 = arith.constant -5.000000e+00 : f32
    %26 = vector.broadcast %cst_18 : f32 to vector<32x128xf32>
    %27 = arith.addf %25, %26 : vector<32x128xf32>
    %28 = math.roundeven %27 : vector<32x128xf32>
    %cst_19 = arith.constant -1.280000e+02 : f32
    %cst_20 = arith.constant 1.270000e+02 : f32
    %29 = vector.broadcast %cst_19 : f32 to vector<32x128xf32>
    %30 = arith.maximumf %29, %28 : vector<32x128xf32>
    %31 = vector.broadcast %cst_20 : f32 to vector<32x128xf32>
    %32 = arith.minimumf %31, %30 : vector<32x128xf32>
    %33 = arith.fptosi %32 : vector<32x128xf32> to vector<32x128xi8>
    %c0_21 = arith.constant 0 : index
    %c0_22 = arith.constant 0 : index
    %c0_23 = arith.constant 0 : index
    %34 = vector.load %arg8[%c0_21, %c0_22, %c0_23] : memref<1x32x128xi8, #tpu.memory_space<vmem>>, vector<1x32x128xi8>
    %35 = vector.shape_cast %34 : vector<1x32x128xi8> to vector<32x128xi8>
    %36 = vector.shape_cast %33 : vector<32x128xi8> to vector<1x32x128xi8>
    tpu.vector_store %arg8[%c0_21, %c0_22, %c0_23], %36 {strides = array<i32>} : memref<1x32x128xi8, #tpu.memory_space<vmem>>, vector<1x32x128xi8>,
    return
  }
  func.func @transform_0(%arg0: i32, %arg1: i32, %arg2: i32) -> (i32, i32, i32) {
    %c0_i32 = arith.constant 0 : i32
    %c0_i32_0 = arith.constant 0 : i32
    return %arg0, %c0_i32, %arg2 : i32, i32, i32
  }
  func.func @transform_1(%arg0: i32, %arg1: i32, %arg2: i32) -> (i32, i32, i32) {
    %c1_i32 = arith.constant 1 : i32
    %0 = arith.addi %arg2, %c1_i32 : i32
    %c0_i32 = arith.constant 0 : i32
    %c0_i32_0 = arith.constant 0 : i32
    return %arg0, %c0_i32, %0 : i32, i32, i32
  }
  func.func @transform_2(%arg0: i32, %arg1: i32, %arg2: i32) -> (i32, i32, i32) {
    %c0_i32 = arith.constant 0 : i32
    %c0_i32_0 = arith.constant 0 : i32
    %c0_i32_1 = arith.constant 0 : i32
    return %c0_i32, %arg1, %c0_i32_0 : i32, i32, i32
  }
  func.func @transform_3(%arg0: i32, %arg1: i32, %arg2: i32) -> (i32, i32) {
    %c0_i32 = arith.constant 0 : i32
    %c0_i32_0 = arith.constant 0 : i32
    return %arg1, %c0_i32 : i32, i32
  }
  func.func @transform_4(%arg0: i32, %arg1: i32, %arg2: i32) -> (i32, i32) {
    %c0_i32 = arith.constant 0 : i32
    %c0_i32_0 = arith.constant 0 : i32
    return %arg1, %c0_i32 : i32, i32
  }
  func.func @transform_5(%arg0: i32, %arg1: i32, %arg2: i32) -> (i32, i32, i32) {
    %c0_i32 = arith.constant 0 : i32
    return %arg0, %arg1, %arg2 : i32, i32, i32
  }
}

</mosaic_0001>

<llo_original>
// kernel: tpu_custom_call.1
$region0: #{tpu_custom_call.1}
  #allocation0 [shape = 'u32[]', space=smem, size = 0x4, offset = 0x4, fixed_abs, tag = 'smem constant byte address 0x4 - core index']
  #allocation1 [shape = 'u32[144,128]{1,0:T(1,128)}', space=vmem, size = 0x12000, scoped, tag = 'internal scratch']
  %s0 = inlined_call_operand.vmem [shape: s8[2,32,256], index: 0, kind: input, shape index: {}]
  %s1 = inlined_call_operand.vmem [shape: s8[2,32,256], index: 1, kind: input, shape index: {}]
  %s2 = inlined_call_operand.hbm [shape: s8[3,32,32], index: 2, kind: input, shape index: {}]
  %s3 = inlined_call_operand.vmem [shape: s32[32,1], index: 3, kind: input, shape index: {}]
  %s4 = inlined_call_operand.vmem [shape: f32[32,1], index: 4, kind: input, shape index: {}]
  %s5 = inlined_call_operand.hbm [shape: s8[2,32,128], index: 5, kind: output, shape index: {}]
  %s6 = sld [smem:[#allocation0]]
  $region57: #{tpu_custom_call.1} parent=0
    _
  %s8 = ssub.s32 1, %s6
  %s9 = scalar_select 0, %s8, %s6
  $region1: #{tpu_custom_call.1} parent=0
    #allocation2 [shape = 'u8[12288]{0}', space=vmem, size = 0x3000, scoped, tag = 'input window, operand 2, single buffered']
    #allocation3 [shape = 's32[2]{0}', space=sflag, size = 0x8, scoped, tag = 'scoped memory for tpu_custom_call.1']
    #allocation4 [shape = 's32[2]{0}', space=sflag, size = 0x8, scoped, tag = 'scoped memory for tpu_custom_call.1']
    #allocation5 [shape = 'u8[8192]{0}', space=vmem, size = 0x2000, scoped, tag = 'output window, operand 0']
    %10 = vsyncpa [#allocation3], 0
    %11 = vsyncpa [#allocation4], 0
    %s12 = scalar_lea.sflag [#allocation4], 1
    %13 = vsyncpa %s12, 0
    loop: start=0, step=1, limit=4
    $region2: #{tpu_custom_call.1} parent=1 // loop_pre_header
      _
    $region3: #{tpu_custom_call.1} parent=1 // loop_header
      %s15 = sphi 0, %s19
      %p16 = scmp.ge.s32.totalorder %s15, 4
      %s22 = sphi 0, %s41
      %s23 = sphi 0, %s37
      %s24 = sphi 0, %s33
      %s25 = sphi 0, %s22
      %s26 = sphi 0, %s23
      %s27 = sphi 0, %s24
      %s28 = sphi 0, %s25
      %s29 = sphi 0, %s26
      %s30 = sphi 0, %s27
      %s46 = sphi 0, %s48
      %s49 = sphi 0, %s46
      %s50 = sphi 0, %s49
      %s66 = sphi 0, %s50
      %s76 = sphi 0, %s78
      %s79 = sphi 0, %s76
      %s80 = sphi 0, %s79
      %s96 = sphi 0, %s80
      %s102 = sphi 0, %s104
      %s105 = sphi 0, %s102
      %s106 = sphi 0, %s105
      %s122 = sphi 0, %s106
      %s128 = sphi 0, %s130
      %s131 = sphi 0, %s128
      %s132 = sphi 0, %s131
      %s148 = sphi 0, %s132
      %s154 = sphi 0, %s156
      %s157 = sphi 0, %s154
      %s158 = sphi 0, %s157
      %s174 = sphi 0, %s158
      %s184 = sphi 0, %s186
      %s187 = sphi 0, %s184
      %s188 = sphi 0, %s187
      %s204 = sphi 0, %s188
    $region4: #{tpu_custom_call.1} parent=1 // loop_header_branch
      %18 = sbr.rel (%p16) target = $region8
    $region5: #{tpu_custom_call.1} parent=1 // loop_body
      %s20 = ssub.s32 %s15, 1
      %s21 = ssub.s32 %s15, 2
      %s31 = sadd.s32 1, %s24
      %p32 = scmp.ge.s32.totalorder %s31, 1
      %s33 = scalar_select %p32, 0, %s31
      %s34 = sadd.s32 1, %s23
      %s35 = scalar_select %p32, %s34, %s23
      %p36 = scmp.ge.s32.totalorder %s35, 1
      %s37 = scalar_select %p36, 0, %s35
      %s38 = sadd.s32 1, %s22
      %s39 = scalar_select %p36, %s38, %s22
      %p40 = scmp.ge.s32.totalorder %s39, 2
      %s41 = scalar_select %p40, 0, %s39
      %s42 = ssub.s32 %s22, %s41
      %s43 = ssub.s32 %s24, %s33
      %s44 = sor.u32 %s42, %s43
      %p45 = scmp.eq.s32.totalorder %s44, 0
      %s47 = sadd.s32 %s46, 1
      %s48 = scalar_select %p45, %s46, %s47
      %p51 = pneg %p45
      %p52 = scmp.eq.s32.totalorder %s15, 1
      %p53 = por %p51, %p52
      %p54 = scmp.ne.s32.totalorder %s46, %s49
      %p55 = scmp.eq.s32.totalorder %s15, 0
      %p56 = por %p54, %p55
      %p57 = scmp.ne.s32.totalorder %s46, %s49
      %p58 = scmp.eq.s32.totalorder %s20, 1
      %p59 = por %p57, %p58
      %p60 = scmp.ne.s32.totalorder %s49, %s50
      %p61 = scmp.eq.s32.totalorder %s20, 0
      %p62 = por %p60, %p61
      %p63 = scmp.ne.s32.totalorder %s49, %s50
      %p64 = scmp.eq.s32.totalorder %s21, 1
      %p65 = por %p63, %p64
      %p67 = scmp.ne.s32.totalorder %s50, %s66
      %p68 = scmp.eq.s32.totalorder %s21, 0
      %p69 = por %p67, %p68
      %s70 = sadd.s32 %s24, 1
      %s71 = sadd.s32 %s33, 1
      %s72 = ssub.s32 %s22, %s41
      %s73 = ssub.s32 %s70, %s71
      %s74 = sor.u32 %s72, %s73
      %p75 = scmp.eq.s32.totalorder %s74, 0
      %s77 = sadd.s32 %s76, 1
      %s78 = scalar_select %p75, %s76, %s77
      %p81 = pneg %p75
      %p82 = scmp.eq.s32.totalorder %s15, 1
      %p83 = por %p81, %p82
      %p84 = scmp.ne.s32.totalorder %s76, %s79
      %p85 = scmp.eq.s32.totalorder %s15, 0
      %p86 = por %p84, %p85
      %p87 = scmp.ne.s32.totalorder %s76, %s79
      %p88 = scmp.eq.s32.totalorder %s20, 1
      %p89 = por %p87, %p88
      %p90 = scmp.ne.s32.totalorder %s79, %s80
      %p91 = scmp.eq.s32.totalorder %s20, 0
      %p92 = por %p90, %p91
      %p93 = scmp.ne.s32.totalorder %s79, %s80
      %p94 = scmp.eq.s32.totalorder %s21, 1
      %p95 = por %p93, %p94
      %p97 = scmp.ne.s32.totalorder %s80, %s96
      %p98 = scmp.eq.s32.totalorder %s21, 0
      %p99 = por %p97, %p98
      %s100 = ssub.s32 %s23, %s37
      %p101 = scmp.eq.s32.totalorder %s100, 0
      %s103 = sadd.s32 %s102, 1
      %s104 = scalar_select %p101, %s102, %s103
      %p107 = pneg %p101
      %p108 = scmp.eq.s32.totalorder %s15, 1
      %p109 = por %p107, %p108
      %p110 = scmp.ne.s32.totalorder %s102, %s105
      %p111 = scmp.eq.s32.totalorder %s15, 0
      %p112 = por %p110, %p111
      %p113 = scmp.ne.s32.totalorder %s102, %s105
      %p114 = scmp.eq.s32.totalorder %s20, 1
      %p115 = por %p113, %p114
      %p116 = scmp.ne.s32.totalorder %s105, %s106
      %p117 = scmp.eq.s32.totalorder %s20, 0
      %p118 = por %p116, %p117
      %p119 = scmp.ne.s32.totalorder %s105, %s106
      %p120 = scmp.eq.s32.totalorder %s21, 1
      %p121 = por %p119, %p120
      %p123 = scmp.ne.s32.totalorder %s106, %s122
      %p124 = scmp.eq.s32.totalorder %s21, 0
      %p125 = por %p123, %p124
      %s126 = ssub.s32 %s23, %s37
      %p127 = scmp.eq.s32.totalorder %s126, 0
      %s129 = sadd.s32 %s128, 1
      %s130 = scalar_select %p127, %s128, %s129
      %p133 = pneg %p127
      %p134 = scmp.eq.s32.totalorder %s15, 1
      %p135 = por %p133, %p134
      %p136 = scmp.ne.s32.totalorder %s128, %s131
      %p137 = scmp.eq.s32.totalorder %s15, 0
      %p138 = por %p136, %p137
      %p139 = scmp.ne.s32.totalorder %s128, %s131
      %p140 = scmp.eq.s32.totalorder %s20, 1
      %p141 = por %p139, %p140
      %p142 = scmp.ne.s32.totalorder %s131, %s132
      %p143 = scmp.eq.s32.totalorder %s20, 0
      %p144 = por %p142, %p143
      %p145 = scmp.ne.s32.totalorder %s131, %s132
      %p146 = scmp.eq.s32.totalorder %s21, 1
      %p147 = por %p145, %p146
      %p149 = scmp.ne.s32.totalorder %s132, %s148
      %p150 = scmp.eq.s32.totalorder %s21, 0
      %p151 = por %p149, %p150
      %s152 = ssub.s32 %s23, %s37
      %p153 = scmp.eq.s32.totalorder %s152, 0
      %s155 = sadd.s32 %s154, 1
      %s156 = scalar_select %p153, %s154, %s155
      %p159 = pneg %p153
      %p160 = scmp.eq.s32.totalorder %s15, 1
      %p161 = por %p159, %p160
      %p162 = scmp.ne.s32.totalorder %s154, %s157
      %p163 = scmp.eq.s32.totalorder %s15, 0
      %p164 = por %p162, %p163
      %p165 = scmp.ne.s32.totalorder %s154, %s157
      %p166 = scmp.eq.s32.totalorder %s20, 1
      %p167 = por %p165, %p166
      %p168 = scmp.ne.s32.totalorder %s157, %s158
      %p169 = scmp.eq.s32.totalorder %s20, 0
      %p170 = por %p168, %p169
      %p171 = scmp.ne.s32.totalorder %s157, %s158
      %p172 = scmp.eq.s32.totalorder %s21, 1
      %p173 = por %p171, %p172
      %p175 = scmp.ne.s32.totalorder %s158, %s174
      %p176 = scmp.eq.s32.totalorder %s21, 0
      %p177 = por %p175, %p176
      %s178 = ssub.s32 %s22, %s41
      %s179 = ssub.s32 %s23, %s37
      %s180 = sor.u32 %s178, %s179
      %s181 = ssub.s32 %s24, %s33
      %s182 = sor.u32 %s180, %s181
      %p183 = scmp.eq.s32.totalorder %s182, 0
      %s185 = sadd.s32 %s184, 1
      %s186 = scalar_select %p183, %s184, %s185
      %p189 = pneg %p183
      %p190 = scmp.eq.s32.totalorder %s15, 1
      %p191 = por %p189, %p190
      %p192 = scmp.ne.s32.totalorder %s184, %s187
      %p193 = scmp.eq.s32.totalorder %s15, 0
      %p194 = por %p192, %p193
      %p195 = scmp.ne.s32.totalorder %s184, %s187
      %p196 = scmp.eq.s32.totalorder %s20, 1
      %p197 = por %p195, %p196
      %p198 = scmp.ne.s32.totalorder %s187, %s188
      %p199 = scmp.eq.s32.totalorder %s20, 0
      %p200 = por %p198, %p199
      %p201 = scmp.ne.s32.totalorder %s187, %s188
      %p202 = scmp.eq.s32.totalorder %s21, 1
      %p203 = por %p201, %p202
      %p205 = scmp.ne.s32.totalorder %s188, %s204
      %p206 = scmp.eq.s32.totalorder %s21, 0
      %p207 = por %p205, %p206
      %p208 = scmp.le.s32.totalorder 1, %s15
      %p209 = scmp.lt.s32.totalorder %s15, 3
      %p210 = pnand %p208, %p209
      %p211 = pneg %p210
      // Predicated region
      $region9: #{tpu_custom_call.1} parent=5 // pred_check
        _
      $region10: #{tpu_custom_call.1} parent=5 // pred_check_branch
        %213 = sbr.rel (%p210) target = $region12
      $region11: #{tpu_custom_call.1} parent=5 // pred_region
        %s214 = ssub.s32 %s15, 1
        // Predicated region
        $region13: #{tpu_custom_call.1} parent=11 // pred_check
          %p215 = pneg %p118
        $region14: #{tpu_custom_call.1} parent=11 // pred_check_branch
          %217 = sbr.rel (%p215) target = $region16
        $region15: #{tpu_custom_call.1} parent=11 // pred_region
          %s219 = ssub.s32 384, 384
          %220 = vsyncadd [#allocation3], %s219
          %s221 = smul.addr %s26, 128
          %s222 = scalar_lea.hbm %s2, %s221
          %s223 = sshll.u32 [#allocation2], 4
          %s224 = int_to_ptr.vmem [resolvable:$true] %s223
          %229 = dma.hbm_to_vmem [thread:$0]  %s222, 384, %s224, [#allocation3], 128, 128, 8
        $region16: #{tpu_custom_call.1} parent=11 // pred_fallthru
          _
        // Predicated region
        $region17: #{tpu_custom_call.1} parent=11 // pred_check
          %p230 = pneg %p144
        $region18: #{tpu_custom_call.1} parent=11 // pred_check_branch
          %232 = sbr.rel (%p230) target = $region20
        $region19: #{tpu_custom_call.1} parent=11 // pred_region
          %s233 = smul.u32 4, %s26
          %p234 = scmp.lt.s32.totalorder %s233, 3
          %s235 = scalar_select %p234, %s233, 3
          %s236 = smul.addr %s235, 8
          %s237 = scalar_lea.vmem %s3, %s236
          %s238 = smul.u32 4, %s26
        $region20: #{tpu_custom_call.1} parent=11 // pred_fallthru
          _
        // Predicated region
        $region21: #{tpu_custom_call.1} parent=11 // pred_check
          %p239 = pneg %p170
        $region22: #{tpu_custom_call.1} parent=11 // pred_check_branch
          %241 = sbr.rel (%p239) target = $region24
        $region23: #{tpu_custom_call.1} parent=11 // pred_region
          %s242 = smul.u32 4, %s26
          %p243 = scmp.lt.s32.totalorder %s242, 3
          %s244 = scalar_select %p243, %s242, 3
          %s245 = smul.addr %s244, 8
          %s246 = scalar_lea.vmem %s4, %s245
          %s247 = smul.u32 4, %s26
        $region24: #{tpu_custom_call.1} parent=11 // pred_fallthru
          _
      $region12: #{tpu_custom_call.1} parent=5 // pred_fallthru
        _
      %p248 = scmp.lt.s32.totalorder %s15, 2
      // Predicated region
      $region25: #{tpu_custom_call.1} parent=5 // pred_check
        %p249 = pneg %p248
      $region26: #{tpu_custom_call.1} parent=5 // pred_check_branch
        %251 = sbr.rel (%p249) target = $region28
      $region27: #{tpu_custom_call.1} parent=5 // pred_region
        // Predicated region
        $region29: #{tpu_custom_call.1} parent=27 // pred_check
          %p252 = pneg %p56
        $region30: #{tpu_custom_call.1} parent=27 // pred_check_branch
          %254 = sbr.rel (%p252) target = $region32
        $region31: #{tpu_custom_call.1} parent=27 // pred_region
          %p255 = scmp.lt.s32.totalorder %s22, 1
          %s256 = scalar_select %p255, %s22, 1
          %p257 = scmp.lt.s32.totalorder %s24, 1
          %s258 = scalar_select %p257, %s24, 1
          %s259 = smul.addr %s256, 2
          %s260 = sadd.s32 %s258, %s259
          %s261 = smul.addr %s260, 8
          %s262 = scalar_lea.vmem %s0, %s261
        $region32: #{tpu_custom_call.1} parent=27 // pred_fallthru
          _
        // Predicated region
        $region33: #{tpu_custom_call.1} parent=27 // pred_check
          %p263 = pneg %p86
        $region34: #{tpu_custom_call.1} parent=27 // pred_check_branch
          %265 = sbr.rel (%p263) target = $region36
        $region35: #{tpu_custom_call.1} parent=27 // pred_region
          %s266 = sadd.s32 %s24, 1
          %p267 = scmp.lt.s32.totalorder %s22, 1
          %s268 = scalar_select %p267, %s22, 1
          %p269 = scmp.lt.s32.totalorder %s266, 1
          %s270 = scalar_select %p269, %s266, 1
          %s271 = smul.addr %s268, 2
          %s272 = sadd.s32 %s270, %s271
          %s273 = smul.addr %s272, 8
          %s274 = scalar_lea.vmem %s1, %s273
          %s275 = sadd.s32 %s24, 1
        $region36: #{tpu_custom_call.1} parent=27 // pred_fallthru
          _
      $region28: #{tpu_custom_call.1} parent=5 // pred_fallthru
        _
      %p276 = scmp.le.s32.totalorder 1, %s15
      %p277 = scmp.lt.s32.totalorder %s15, 3
      %p278 = pnand %p276, %p277
      %p279 = pneg %p278
      // Predicated region
      $region37: #{tpu_custom_call.1} parent=5 // pred_check
        _
      $region38: #{tpu_custom_call.1} parent=5 // pred_check_branch
        %281 = sbr.rel (%p278) target = $region40
      $region39: #{tpu_custom_call.1} parent=5 // pred_region
        %s282 = ssub.s32 %s15, 1
        // Predicated region
        $region41: #{tpu_custom_call.1} parent=39 // pred_check
          %p283 = pneg %p118
        $region42: #{tpu_custom_call.1} parent=39 // pred_check_branch
          %285 = sbr.rel (%p283) target = $region44
        $region43: #{tpu_custom_call.1} parent=39 // pred_region
          %286 = dma.done [#allocation3], 384
        $region44: #{tpu_custom_call.1} parent=39 // pred_fallthru
          _
        %p287 = scmp.lt.s32.totalorder %s25, 1
        %s288 = scalar_select %p287, %s25, 1
        %p289 = scmp.lt.s32.totalorder %s27, 1
        %s290 = scalar_select %p289, %s27, 1
        %s291 = smul.addr %s288, 2
        %s292 = sadd.s32 %s290, %s291
        %s293 = smul.addr %s292, 8
        %s294 = scalar_lea.vmem %s0, %s293
        %p295 = pneg %p62
        %p296 = pneg %p59
        %s297 = sadd.s32 %s27, 1
        %p298 = scmp.lt.s32.totalorder %s25, 1
        %s299 = scalar_select %p298, %s25, 1
        %p300 = scmp.lt.s32.totalorder %s297, 1
        %s301 = scalar_select %p300, %s297, 1
        %s302 = smul.addr %s299, 2
        %s303 = sadd.s32 %s301, %s302
        %s304 = smul.addr %s303, 8
        %s305 = scalar_lea.vmem %s1, %s304
        %p306 = pneg %p92
        %p307 = pneg %p89
        %p308 = pneg %p118
        %p309 = pneg %p115
        %s310 = smul.u32 4, %s26
        %p311 = scmp.lt.s32.totalorder %s310, 3
        %s312 = scalar_select %p311, %s310, 3
        %s313 = smul.addr %s312, 8
        %s314 = scalar_lea.vmem %s3, %s313
        %p315 = pneg %p144
        %p316 = pneg %p141
        %s317 = smul.u32 4, %s26
        %p318 = scmp.lt.s32.totalorder %s317, 3
        %s319 = scalar_select %p318, %s317, 3
        %s320 = smul.addr %s319, 8
        %s321 = scalar_lea.vmem %s4, %s320
        %p322 = pneg %p170
        %p323 = pneg %p167
        %p324 = pneg %p200
        %p325 = pneg %p197
        %s326 = sand.u32 %s187, 1
        %s327 = scalar_lea.sflag [#allocation4], %s326
        %s328 = sand.u32 %s187, 1
        %s329 = smul.addr %s328, 8
        %s330 = scalar_lea.vmem [#allocation5], %s329
        %p331 = scmp.lt.s32.totalorder %s25, 1
        %s332 = scalar_select %p331, %s25, 1
        %p333 = scmp.lt.s32.totalorder %s27, 1
        %s334 = scalar_select %p333, %s27, 1
        %s335 = smul.addr %s332, 2
        %s336 = sadd.s32 %s334, %s335
        %s337 = smul.addr %s336, 8
        %s338 = scalar_lea.vmem %s0, %s337
        %s339 = sadd.s32 %s27, 1
        %p340 = scmp.lt.s32.totalorder %s25, 1
        %s341 = scalar_select %p340, %s25, 1
        %p342 = scmp.lt.s32.totalorder %s339, 1
        %s343 = scalar_select %p342, %s339, 1
        %s344 = smul.addr %s341, 2
        %s345 = sadd.s32 %s343, %s344
        %s346 = smul.addr %s345, 8
        %s347 = scalar_lea.vmem %s1, %s346
        %s348 = sadd.s32 %s27, 1
        %s349 = smul.u32 4, %s26
        %p350 = scmp.lt.s32.totalorder %s349, 3
        %s351 = scalar_select %p350, %s349, 3
        %s352 = smul.addr %s351, 8
        %s353 = scalar_lea.vmem %s3, %s352
        %s354 = smul.u32 4, %s26
        %s355 = smul.u32 4, %s26
        %p356 = scmp.lt.s32.totalorder %s355, 3
        %s357 = scalar_select %p356, %s355, 3
        %s358 = smul.addr %s357, 8
        %s359 = scalar_lea.vmem %s4, %s358
        %s360 = smul.u32 4, %s26
        %v362 = vld [vmem:[%s338] sm:$0xff]
        %v363 = vld [vmem:[%s347] sm:$0xff]
        %v364 = vld [vmem:[#allocation2] sm:$0xff]
        %s365 = scalar_lea.vmem [#allocation2], 8
        %v366 = vld [vmem:[%s365] sm:$0xff]
        %v367 = vunpack.c.l.s8.bf16 %v366
        %v368 = vunpack.c.h.s8.bf16 %v366
        %v369 = vunpack.c.l.s8.bf16 %v362
        %v370 = vunpack.c.l.s8.bf16 %v363
        %v371 = vunpack.c.h.s8.bf16 %v362
        %v372 = vunpack.c.h.s8.bf16 %v363
        %v373 = vcvt.s32.f32 0
        %378 = vrot.lane.b32.xlu0 %v369, 127
        %v379 = vpop.permute.xlu0 %378
        %380 = vrot.lane.b32.xlu0 %v370, 127
        %v381 = vpop.permute.xlu0 %380
        %382 = vrot.lane.b32.xlu0 %v371, 127
        %v383 = vpop.permute.xlu0 %382
        %384 = vrot.lane.b32.xlu0 %v372, 127
        %v385 = vpop.permute.xlu0 %384
        %vm386 = vcmask 1039360
        %v387 = vsel %vm386, %v379, %v381
        %v388 = vsel %vm386, %v383, %v385
        %vm391 = vcmask 261120
        %v393 = vsel %vm391, %v367, 0
        %v396 = vsel %vm391, %v368, 0
        %398 = vmatprep.subr.bf16.mxu0 0
        %399 = vmatpush1.bf16.msra.mxu0 %v387
        %400 = vmatprep.subr.bf16.mxu0 0
        %401 = vmatpush1.bf16.msra.mxu0 %v388
        %402 = vmatprep.subr.bf16.mxu0 0
        %403 = vmatpush1.bf16.msra.mxu0 0
        %404 = vmatprep.subr.bf16.mxu0 0
        %405 = vmatpush1.bf16.msra.mxu0 0
        %406 = vmatprep.subr.bf16.mxu0 0
        %407 = vmatpush1.bf16.msra.mxu0 0
        %408 = vmatprep.subr.bf16.mxu0 0
        %409 = vmatpush1.bf16.msra.mxu0 0
        %410 = vmatprep.subr.bf16.mxu0 0
        %411 = vmatpush1.bf16.msra.mxu0 0
        %412 = vmatprep.subr.bf16.mxu0 0
        %413 = vmatpush1.bf16.msra.mxu0 0
        %414 = vmatprep.subr.bf16.mxu0 0
        %415 = vmatpush1.bf16.msra.mxu0 0
        %416 = vmatprep.subr.bf16.mxu0 0
        %417 = vmatpush1.bf16.msra.mxu0 0
        %418 = vmatprep.subr.bf16.mxu0 0
        %419 = vmatpush1.bf16.msra.mxu0 0
        %420 = vmatprep.subr.bf16.mxu0 0
        %421 = vmatpush1.bf16.msra.mxu0 0
        %422 = vmatprep.subr.bf16.mxu0 0
        %423 = vmatpush1.bf16.msra.mxu0 0
        %424 = vmatprep.subr.bf16.mxu0 0
        %425 = vmatpush1.bf16.msra.mxu0 0
        %426 = vmatprep.subr.bf16.mxu0 0
        %427 = vmatpush1.bf16.msra.mxu0 0
        %428 = vmatprep.subr.bf16.mxu0 0
        %429 = vmatpush1.bf16.msra.mxu0 0
        %430 = vmatprep.mubr.bf16.mxu0 0
        %431 = vmatmul.mubr.bf16.gmra.mrb[0].mxu0 %v393
        %v432 = vpop.f32.mrb[0].mxu0
        %v433 = vadd.f32 %v373, %v432
        %v434 = vpop.f32.mrb[0].mxu0
        %v435 = vpop.f32.mrb[0].mxu0
        %v436 = vadd.f32 %v373, %v435
        %v437 = vpop.f32.mrb[0].mxu0
        %438 = vmatprep.mubr.bf16.mxu0 0
        %439 = vmatmul.mubr.bf16.gmra.mrb[0].mxu0 %v396
        %v440 = vpop.f32.mrb[0].mxu0
        %v441 = vadd.f32 %v373, %v440
        %v442 = vpop.f32.mrb[0].mxu0
        %v443 = vpop.f32.mrb[0].mxu0
        %v444 = vadd.f32 %v373, %v443
        %v445 = vpop.f32.mrb[0].mxu0
        %446 = vdwg.mxu0
        %v447 = vcvt.f32.s32.to.zero.pseudo %v433
        %v448 = vcvt.f32.s32.to.zero.pseudo %v436
        %v449 = vcvt.f32.s32.to.zero.pseudo %v441
        %v450 = vcvt.f32.s32.to.zero.pseudo %v444
        %v451 = vunpack.c.l.s8.bf16 %v364
        %v452 = vunpack.c.h.s8.bf16 %v364
        %v453 = vcvt.s32.f32 %v447
        %v454 = vcvt.s32.f32 %v448
        %v455 = vcvt.s32.f32 %v449
        %v456 = vcvt.s32.f32 %v450
        %v458 = vsel %vm391, %v451, 0
        %v461 = vsel %vm391, %v452, 0
        %463 = vmatprep.subr.bf16.mxu0 0
        %464 = vmatpush1.bf16.msra.mxu0 %v369
        %465 = vmatprep.subr.bf16.mxu0 0
        %466 = vmatpush1.bf16.msra.mxu0 %v371
        %467 = vmatprep.subr.bf16.mxu0 0
        %468 = vmatpush1.bf16.msra.mxu0 0
        %469 = vmatprep.subr.bf16.mxu0 0
        %470 = vmatpush1.bf16.msra.mxu0 0
        %471 = vmatprep.subr.bf16.mxu0 0
        %472 = vmatpush1.bf16.msra.mxu0 0
        %473 = vmatprep.subr.bf16.mxu0 0
        %474 = vmatpush1.bf16.msra.mxu0 0
        %475 = vmatprep.subr.bf16.mxu0 0
        %476 = vmatpush1.bf16.msra.mxu0 0
        %477 = vmatprep.subr.bf16.mxu0 0
        %478 = vmatpush1.bf16.msra.mxu0 0
        %479 = vmatprep.subr.bf16.mxu0 0
        %480 = vmatpush1.bf16.msra.mxu0 0
        %481 = vmatprep.subr.bf16.mxu0 0
        %482 = vmatpush1.bf16.msra.mxu0 0
        %483 = vmatprep.subr.bf16.mxu0 0
        %484 = vmatpush1.bf16.msra.mxu0 0
        %485 = vmatprep.subr.bf16.mxu0 0
        %486 = vmatpush1.bf16.msra.mxu0 0
        %487 = vmatprep.subr.bf16.mxu0 0
        %488 = vmatpush1.bf16.msra.mxu0 0
        %489 = vmatprep.subr.bf16.mxu0 0
        %490 = vmatpush1.bf16.msra.mxu0 0
        %491 = vmatprep.subr.bf16.mxu0 0
        %492 = vmatpush1.bf16.msra.mxu0 0
        %493 = vmatprep.subr.bf16.mxu0 0
        %494 = vmatpush1.bf16.msra.mxu0 0
        %495 = vmatprep.mubr.bf16.mxu0 0
        %496 = vmatmul.mubr.bf16.gmra.mrb[0].mxu0 %v458
        %v497 = vpop.f32.mrb[0].mxu0
        %v498 = vadd.f32 %v453, %v497
        %v499 = vpop.f32.mrb[0].mxu0
        %v500 = vpop.f32.mrb[0].mxu0
        %v501 = vadd.f32 %v454, %v500
        %v502 = vpop.f32.mrb[0].mxu0
        %503 = vmatprep.mubr.bf16.mxu0 0
        %504 = vmatmul.mubr.bf16.gmra.mrb[0].mxu0 %v461
        %v505 = vpop.f32.mrb[0].mxu0
        %v506 = vadd.f32 %v455, %v505
        %v507 = vpop.f32.mrb[0].mxu0
        %v508 = vpop.f32.mrb[0].mxu0
        %v509 = vadd.f32 %v456, %v508
        %v510 = vpop.f32.mrb[0].mxu0
        %511 = vdwg.mxu0
        %v512 = vcvt.f32.s32.to.zero.pseudo %v498
        %v513 = vcvt.f32.s32.to.zero.pseudo %v501
        %v514 = vcvt.f32.s32.to.zero.pseudo %v506
        %v515 = vcvt.f32.s32.to.zero.pseudo %v509
        %s516 = scalar_lea.vmem [#allocation2], 16
        %v517 = vld [vmem:[%s516] sm:$0xff]
        %v518 = vunpack.c.l.s8.bf16 %v517
        %v519 = vunpack.c.h.s8.bf16 %v517
        %520 = vrot.lane.b32.xlu0 %v369, 126
        %v521 = vpop.permute.xlu0 %520
        %522 = vrot.lane.b32.xlu0 %v370, 126
        %v523 = vpop.permute.xlu0 %522
        %524 = vrot.lane.b32.xlu0 %v371, 126
        %v525 = vpop.permute.xlu0 %524
        %526 = vrot.lane.b32.xlu0 %v372, 126
        %v527 = vpop.permute.xlu0 %526
        %vm528 = vcmask 1031168
        %v529 = vsel %vm528, %v521, %v523
        %v530 = vsel %vm528, %v525, %v527
        %v534 = vsel %vm391, %v518, 0
        %v537 = vsel %vm391, %v519, 0
        %539 = vmatprep.subr.bf16.mxu0 0
        %540 = vmatpush1.bf16.msra.mxu0 %v529
        %541 = vmatprep.subr.bf16.mxu0 0
        %542 = vmatpush1.bf16.msra.mxu0 %v530
        %543 = vmatprep.subr.bf16.mxu0 0
        %544 = vmatpush1.bf16.msra.mxu0 0
        %545 = vmatprep.subr.bf16.mxu0 0
        %546 = vmatpush1.bf16.msra.mxu0 0
        %547 = vmatprep.subr.bf16.mxu0 0
        %548 = vmatpush1.bf16.msra.mxu0 0
        %549 = vmatprep.subr.bf16.mxu0 0
        %550 = vmatpush1.bf16.msra.mxu0 0
        %551 = vmatprep.subr.bf16.mxu0 0
        %552 = vmatpush1.bf16.msra.mxu0 0
        %553 = vmatprep.subr.bf16.mxu0 0
        %554 = vmatpush1.bf16.msra.mxu0 0
        %555 = vmatprep.subr.bf16.mxu0 0
        %556 = vmatpush1.bf16.msra.mxu0 0
        %557 = vmatprep.subr.bf16.mxu0 0
        %558 = vmatpush1.bf16.msra.mxu0 0
        %559 = vmatprep.subr.bf16.mxu0 0
        %560 = vmatpush1.bf16.msra.mxu0 0
        %561 = vmatprep.subr.bf16.mxu0 0
        %562 = vmatpush1.bf16.msra.mxu0 0
        %563 = vmatprep.subr.bf16.mxu0 0
        %564 = vmatpush1.bf16.msra.mxu0 0
        %565 = vmatprep.subr.bf16.mxu0 0
        %566 = vmatpush1.bf16.msra.mxu0 0
        %567 = vmatprep.subr.bf16.mxu0 0
        %568 = vmatpush1.bf16.msra.mxu0 0
        %569 = vmatprep.subr.bf16.mxu0 0
        %570 = vmatpush1.bf16.msra.mxu0 0
        %571 = vmatprep.mubr.bf16.mxu0 0
        %572 = vmatmul.mubr.bf16.gmra.mrb[0].mxu0 %v534
        %v573 = vpop.f32.mrb[0].mxu0
        %v574 = vadd.f32 %v373, %v573
        %v575 = vpop.f32.mrb[0].mxu0
        %v576 = vpop.f32.mrb[0].mxu0
        %v577 = vadd.f32 %v373, %v576
        %v578 = vpop.f32.mrb[0].mxu0
        %579 = vmatprep.mubr.bf16.mxu0 0
        %580 = vmatmul.mubr.bf16.gmra.mrb[0].mxu0 %v537
        %v581 = vpop.f32.mrb[0].mxu0
        %v582 = vadd.f32 %v373, %v581
        %v583 = vpop.f32.mrb[0].mxu0
        %v584 = vpop.f32.mrb[0].mxu0
        %v585 = vadd.f32 %v373, %v584
        %v586 = vpop.f32.mrb[0].mxu0
        %587 = vdwg.mxu0
        %v588 = vcvt.f32.s32.to.zero.pseudo %v574
        %v589 = vcvt.f32.s32.to.zero.pseudo %v577
        %v590 = vcvt.f32.s32.to.zero.pseudo %v582
        %v591 = vcvt.f32.s32.to.zero.pseudo %v585
        %v592 = vadd.s32 %v512, %v588
        %v593 = vadd.s32 %v513, %v589
        %v594 = vadd.s32 %v514, %v590
        %v595 = vadd.s32 %v515, %v591
        %v596 = vld [vmem:[%s353] sm:$0xff]
        %v597 = vld [vmem:[%s353 + $0x8] sm:$0xff]
        %v598 = vld [vmem:[%s353 + $0x10] sm:$0xff]
        %v599 = vld [vmem:[%s353 + $0x18] sm:$0xff]
        %600 = vset.pattern.permute.xlu0 0
        %601 = vperm.xlu0 %600, %v596
        %v602 = vpop.permute.xlu0 %601
        %603 = vset.pattern.permute.xlu0 0
        %604 = vperm.xlu0 %603, %v597
        %v605 = vpop.permute.xlu0 %604
        %606 = vset.pattern.permute.xlu0 0
        %607 = vperm.xlu0 %606, %v598
        %v608 = vpop.permute.xlu0 %607
        %609 = vset.pattern.permute.xlu0 0
        %610 = vperm.xlu0 %609, %v599
        %v611 = vpop.permute.xlu0 %610
        %v612 = vadd.s32 %v592, %v602
        %v613 = vadd.s32 %v593, %v605
        %v614 = vadd.s32 %v594, %v608
        %v615 = vadd.s32 %v595, %v611
        %v616 = vcvt.s32.f32 %v612
        %v617 = vcvt.s32.f32 %v613
        %v618 = vcvt.s32.f32 %v614
        %v619 = vcvt.s32.f32 %v615
        %v620 = vld [vmem:[%s359] sm:$0xff]
        %v621 = vld [vmem:[%s359 + $0x8] sm:$0xff]
        %v622 = vld [vmem:[%s359 + $0x10] sm:$0xff]
        %v623 = vld [vmem:[%s359 + $0x18] sm:$0xff]
        %625 = vset.pattern.permute.xlu0 0
        %626 = vperm.xlu0 %625, %v620
        %v627 = vpop.permute.xlu0 %626
        %630 = vset.pattern.permute.xlu0 0
        %631 = vperm.xlu0 %630, %v621
        %v632 = vpop.permute.xlu0 %631
        %635 = vset.pattern.permute.xlu0 0
        %636 = vperm.xlu0 %635, %v622
        %v637 = vpop.permute.xlu0 %636
        %640 = vset.pattern.permute.xlu0 0
        %641 = vperm.xlu0 %640, %v623
        %v642 = vpop.permute.xlu0 %641
        %v644 = vmul.f32 %v616, %v627
        %v645 = vmul.f32 %v617, %v632
        %v646 = vmul.f32 %v618, %v637
        %v647 = vmul.f32 %v619, %v642
        %v648 = vadd.f32 %v644, -5.0
        %v649 = vadd.f32 %v645, -5.0
        %v650 = vadd.f32 %v646, -5.0
        %v651 = vadd.f32 %v647, -5.0
        %v652 = vround.ne.pseudo %v648
        %v653 = vround.ne.pseudo %v649
        %v654 = vround.ne.pseudo %v650
        %v655 = vround.ne.pseudo %v651
        %v656 = vmax.f32 %v652, -128.0
        %v657 = vmax.f32 %v653, -128.0
        %v658 = vmax.f32 %v654, -128.0
        %v659 = vmax.f32 %v655, -128.0
        %v660 = vmin.f32 %v656, 127.0
        %v661 = vmin.f32 %v657, 127.0
        %v662 = vmin.f32 %v658, 127.0
        %v663 = vmin.f32 %v659, 127.0
        %v664 = vtrunc.f32 %v660
        %v665 = vtrunc.f32 %v661
        %v666 = vtrunc.f32 %v662
        %v667 = vtrunc.f32 %v663
        %v668 = vpack.c.f32.eXmY %v664, %v665, 312
        %v672 = vpack.c.f32.eXmY %v666, %v667, 312
        %v676 = vpack.c.b8 %v672, %v668
        %678 = vst [vmem:[%s330] sm:$0xff] %v676
        %s679 = sand.u32 %s187, 1
        %s680 = scalar_lea.sflag [#allocation4], %s679
        %s681 = sand.u32 %s187, 1
        %s682 = smul.addr %s681, 8
        %s683 = scalar_lea.vmem [#allocation5], %s682
        // Predicated region
        $region45: #{tpu_custom_call.1} parent=39 // pred_check
          %p684 = pneg %p197
        $region46: #{tpu_custom_call.1} parent=39 // pred_check_branch
          %686 = sbr.rel (%p684) target = $region48
        $region47: #{tpu_custom_call.1} parent=39 // pred_region
          %s688 = ssub.s32 128, 128
          %689 = vsyncadd %s680, %s688
          %s690 = sadd.s32 %s27, %s26
          %s691 = sadd.s32 %s690, %s25
          %s692 = smul.addr %s691, 128
          %s693 = scalar_lea.hbm %s5, %s692
          %s695 = sshll.u32 %s683, 4
          %s696 = int_to_ptr.vmem [resolvable:$true] %s695
          %698 = dma.vmem_to_hbm [thread:$0]  %s696, 128, %s693, %s680
        $region48: #{tpu_custom_call.1} parent=39 // pred_fallthru
          _
      $region40: #{tpu_custom_call.1} parent=5 // pred_fallthru
        _
      %p699 = scmp.le.s32.totalorder 2, %s15
      // Predicated region
      $region49: #{tpu_custom_call.1} parent=5 // pred_check
        %p700 = pneg %p699
      $region50: #{tpu_custom_call.1} parent=5 // pred_check_branch
        %702 = sbr.rel (%p700) target = $region52
      $region51: #{tpu_custom_call.1} parent=5 // pred_region
        %s703 = ssub.s32 %s15, 2
        // Predicated region
        $region53: #{tpu_custom_call.1} parent=51 // pred_check
          %p704 = pneg %p203
        $region54: #{tpu_custom_call.1} parent=51 // pred_check_branch
          %706 = sbr.rel (%p704) target = $region56
        $region55: #{tpu_custom_call.1} parent=51 // pred_region
          %s707 = sand.u32 %s188, 1
          %s708 = scalar_lea.sflag [#allocation4], %s707
          %s709 = sand.u32 %s188, 1
          %s710 = smul.addr %s709, 8
          %s711 = scalar_lea.vmem [#allocation5], %s710
          %712 = dma.done %s708, 128
        $region56: #{tpu_custom_call.1} parent=51 // pred_fallthru
          _
      $region52: #{tpu_custom_call.1} parent=5 // pred_fallthru
        _
    $region6: #{tpu_custom_call.1} parent=1 // loop_footer
      %s19 = sadd.s32 1, %s15
    $region7: #{tpu_custom_call.1} parent=1 // loop_footer_branch
      %14 = sbr.rel target = $region3
    $region8: #{tpu_custom_call.1} parent=1 // loop_exit
      _
    %713 = vsyncpa [#allocation3], 1
    %s714 = scalar_lea.sflag [#allocation3], 1
    %715 = vsyncpa %s714, 1
    %716 = vsyncpa [#allocation4], 1
    %s717 = scalar_lea.sflag [#allocation4], 1
    %718 = vsyncpa %s717, 1

</llo_original>
